<compile_context>
chip_gen: v5e
topology: v5e:2x2
jax: 0.10.0
libtpu: 0.0.40
codegen_flags: <defaults>
</compile_context>

<pallas_src>
import jax
import jax.numpy as jnp
from jax.experimental import pallas as pl
from jax.experimental.pallas import tpu as pltpu

BN_EPS = 1e-5
LANE = 128
ROW_ALIGN = 16                 # bf16 packs 2 rows per sublane -> 16-row alignment
MIB = 1 << 20
FUSED_VMEM_BUDGET = 40 * MIB   # conservative: v7x has 64 MiB VMEM per TensorCore


def _round_up(n, m):
    return ((n + m - 1) // m) * m


def _pick_tile(dim_p, candidates=(256, 128)):
    """Largest MXU-friendly tile that divides the padded dim (256 matches v6e/v7x MXU)."""
    for t in candidates:
        if dim_p >= t and dim_p % t == 0:
            return t
    return dim_p


# ---------------------------------------------------------------------------
# Kernel: fused (Linear -> BatchNorm1d(train) -> ReLU)^L [-> Linear + bias]
# ---------------------------------------------------------------------------
def _make_mlp_kernel(num_hidden: int, n_valid: int, n_rows: int, with_final_linear: bool):
    """Refs: x, [W_i (K,H) bf16, gamma_i (1,H) f32, beta_i (1,H) f32] * num_hidden,
             [W_last (K,O) bf16, b_last (1,O) f32]  (if with_final_linear), out."""
    need_row_mask = n_rows != n_valid

    def kernel(*refs):
        x_ref = refs[0]
        out_ref = refs[-1]
        p = refs[1:-1]

        if need_row_mask:
            row_ids = jax.lax.broadcasted_iota(jnp.int32, (n_rows, 1), 0)
            row_mask = (row_ids < n_valid).astype(jnp.float32)
            row_mask_bf16 = row_mask.astype(jnp.bfloat16)
        inv_n = 1.0 / float(n_valid)

        h = x_ref[...]                                   # bf16; padded rows/cols are zero
        idx = 0
        for _ in range(num_hidden):
            w = p[idx][...]                              # (K, H) bf16, pre-transposed
            g = p[idx + 1][...]                          # (1, H) f32
            bt = p[idx + 2][...]                         # (1, H) f32
            idx += 3

            # Linear (bias omitted: exactly cancelled by training-mode BN mean subtraction).
            z = jnp.dot(h, w, preferred_element_type=jnp.float32)

            # BatchNorm1d training statistics. Padded rows of h are zero, so sum(z) needs
            # no mask; mask `centered` once and reuse it for variance AND the output.
            mean = jnp.sum(z, axis=0, keepdims=True) * inv_n
            centered = z - mean
            if need_row_mask:
                centered = centered * row_mask
            var = jnp.sum(centered * centered, axis=0, keepdims=True) * inv_n
            scale = g * jax.lax.rsqrt(var + BN_EPS)      # gamma folded into rsqrt (EUP)

            # Normalize + ReLU, cast back to bf16 for the next MXU matmul.
            h = jnp.maximum(centered * scale + bt, 0.0).astype(jnp.bfloat16)
            if need_row_mask:
                # beta may be nonzero: re-zero padded rows so next layer's sums stay exact.
                h = h * row_mask_bf16

        if with_final_linear:
            w_last = p[idx][...]                         # (K, O) bf16
            b_last = p[idx + 1][...]                     # (1, O) f32
            acc = jnp.dot(h, w_last, preferred_element_type=jnp.float32) + b_last
            out_ref[...] = acc.astype(out_ref.dtype)
        else:
            out_ref[...] = h

    return kernel


# ---------------------------------------------------------------------------
# Fallback final linear (used only when the fused footprint exceeds the budget)
# ---------------------------------------------------------------------------
def _final_linear_kernel(h_ref, w_ref, b_ref, o_ref):
    acc = jnp.dot(h_ref[...], w_ref[...], preferred_element_type=jnp.float32)
    o_ref[...] = (acc + b_ref[...]).astype(o_ref.dtype)


# ---------------------------------------------------------------------------
# Wrapper
# ---------------------------------------------------------------------------
def mlp_forward(x, linear_params, bn_params, num_layers):
    """x: [N, input_dim]; linear_params: list of (W [out,in], b [out]); bn_params: list of (gamma, beta)."""
    if num_layers < 1:
        raise ValueError("number of layers should be positive!")
    assert len(linear_params) == num_layers
    assert len(bn_params) == num_layers - 1

    n, in_dim = x.shape
    out_dim = linear_params[-1][0].shape[0]

    # ---- sublane/lane-dense padded layouts ----------------------------------
    np_rows = _round_up(n, ROW_ALIGN)
    dp_in = _round_up(in_dim, LANE)
    x_pad = jnp.pad(x.astype(jnp.bfloat16), ((0, np_rows - n), (0, dp_in - in_dim)))

    # Hidden-layer operands: pre-transposed lane-dense bf16 weights + f32 gamma/beta.
    hidden_inputs = []
    prev_p = dp_in
    max_act_p = dp_in
    for i in range(num_layers - 1):
        w, _unused_bias = linear_params[i]       # bias cancelled by training-mode BN
        g, bt = bn_params[i]
        d_out = w.shape[0]
        d_out_p = _round_up(d_out, LANE)
        max_act_p = max(max_act_p, d_out_p)
        wt = jnp.pad(w.T.astype(jnp.bfloat16),
                     ((0, prev_p - w.shape[1]), (0, d_out_p - d_out)))
        gp = jnp.pad(g.reshape(1, -1).astype(jnp.float32), ((0, 0), (0, d_out_p - d_out)))
        bp = jnp.pad(bt.reshape(1, -1).astype(jnp.float32), ((0, 0), (0, d_out_p - d_out)))
        hidden_inputs += [wt, gp, bp]
        prev_p = d_out_p
    kp = prev_p

    # Final-layer operands (also lane-dense / pre-transposed).
    w_last, b_last = linear_params[-1]
    op = _round_up(out_dim, LANE)
    max_act_p = max(max_act_p, op)
    wt_last = jnp.pad(w_last.T.astype(jnp.bfloat16),
                      ((0, kp - w_last.shape[1]), (0, op - out_dim)))
    bl = jnp.pad(b_last.reshape(1, -1).astype(jnp.float32), ((0, 0), (0, op - out_dim)))

    # ---- VMEM footprint estimate (resident operands + f32 working activations) ----
    weight_bytes = sum(int(a.size) * a.dtype.itemsize for a in hidden_inputs)
    weight_bytes += int(wt_last.size) * 2 + int(bl.size) * 4
    footprint = (np_rows * dp_in * 2            # x_pad (bf16)
                 + weight_bytes
                 + np_rows * op * 4             # fused output (f32)
                 + 3 * np_rows * max_act_p * 4  # z / centered / h working set (f32 slack)
                 )

    # ---- fast path: whole network in ONE pallas_call -------------------------
    if footprint <= FUSED_VMEM_BUDGET:
        vmem_limit = int(min(64 * MIB, max(2 * footprint, 16 * MIB)))
        out_pad = pl.pallas_call(
            _make_mlp_kernel(num_layers - 1, n, np_rows, with_final_linear=True),
            out_shape=jax.ShapeDtypeStruct((np_rows, op), jnp.float32),
            in_specs=[pl.BlockSpec(memory_space=pltpu.MemorySpace.VMEM)]
                     * (1 + len(hidden_inputs) + 2),
            out_specs=pl.BlockSpec(memory_space=pltpu.MemorySpace.VMEM),
            compiler_params=pltpu.CompilerParams(vmem_limit_bytes=vmem_limit),
        )(x_pad, *hidden_inputs, wt_last, bl)
        return out_pad[:n, :out_dim].astype(x.dtype)

    # ---- fallback: unfused hidden stack + tiled final linear -----------------
    # TODO(synk): for footprints beyond even this (very large batch/hidden), switch the BN
    # layers to a batch-tiled two-pass reduction and prefetch per-layer weights from HBM.
    if num_layers > 1:
        vmem_limit = int(min(128 * MIB, max(2 * footprint, 32 * MIB)))
        h = pl.pallas_call(
            _make_mlp_kernel(num_layers - 1, n, np_rows, with_final_linear=False),
            out_shape=jax.ShapeDtypeStruct((np_rows, kp), jnp.bfloat16),
            in_specs=[pl.BlockSpec(memory_space=pltpu.MemorySpace.VMEM)]
                     * (1 + len(hidden_inputs)),
            out_specs=pl.BlockSpec(memory_space=pltpu.MemorySpace.VMEM),
            compiler_params=pltpu.CompilerParams(vmem_limit_bytes=vmem_limit),
        )(x_pad, *hidden_inputs)
    else:
        h = x_pad

    tm = _pick_tile(np_rows)
    tn = op if op <= 512 else _pick_tile(op)   # small out_dim: keep whole weight resident
    out_pad = pl.pallas_call(
        _final_linear_kernel,
        out_shape=jax.ShapeDtypeStruct((np_rows, op), jnp.float32),
        grid_spec=pltpu.PrefetchScalarGridSpec(
            num_scalar_prefetch=0,
            grid=(np_rows // tm, op // tn),
            in_specs=[
                pl.BlockSpec((tm, kp), lambda i, j: (i, 0)),
                pl.BlockSpec((kp, tn), lambda i, j: (0, j)),
                pl.BlockSpec((1, tn), lambda i, j: (0, j)),
            ],
            out_specs=pl.BlockSpec((tm, tn), lambda i, j: (i, j)),
        ),
        compiler_params=pltpu.CompilerParams(
            dimension_semantics=("parallel", "parallel")),
    )(h, wt_last, bl)
    return out_pad[:n, :out_dim].astype(x.dtype)


# ---------------------------------------------------------------------------
# Init + references
# ---------------------------------------------------------------------------
def _init_params(key, num_layers, input_dim, hidden_dim, output_dim):
    """PyTorch-style init: W,b ~ U(-1/sqrt(fan_in), 1/sqrt(fan_in)); BN gamma=1, beta=0."""
    dims = [input_dim] + [hidden_dim] * (num_layers - 1) + [output_dim]
    linear_params, bn_params = [], []
    for i in range(num_layers):
        fan_in, fan_out = dims[i], dims[i + 1]
        key, kw, kb = jax.random.split(key, 3)
        bound = 1.0 / jnp.sqrt(float(fan_in))
        w = jax.random.uniform(kw, (fan_out, fan_in), jnp.float32, -bound, bound)
        b = jax.random.uniform(kb, (fan_out,), jnp.float32, -bound, bound)
        linear_params.append((w, b))
        if i < num_layers - 1:
            bn_params.append((jnp.ones((fan_out,), jnp.float32),
                              jnp.zeros((fan_out,), jnp.float32)))
    return linear_params, bn_params


def _reference_forward_f32(x, linear_params, bn_params, num_layers):
    """Pure-JAX f32 reference mirroring the PyTorch forward (training-mode BN)."""
    h = x
    for i in range(num_layers - 1):
        w, b = linear_params[i]
        g, bt = bn_params[i]
        z = h @ w.T + b
        mean = jnp.mean(z, axis=0, keepdims=True)
        var = jnp.mean((z - mean) ** 2, axis=0, keepdims=True)
        h = jnp.maximum((z - mean) / jnp.sqrt(var + BN_EPS) * g + bt, 0.0)
    w, b = linear_params[-1]
    return h @ w.T + b


def _reference_forward_bf16(x, linear_params, bn_params, num_layers):
    """Reference mirroring the kernel's numerics (bf16 MXU operands, f32 math)."""
    h = x.astype(jnp.bfloat16)
    for i in range(num_layers - 1):
        w, _b = linear_params[i]                    # bias cancelled by training-mode BN
        g, bt = bn_params[i]
        z = jnp.dot(h, w.T.astype(jnp.bfloat16), preferred_element_type=jnp.float32)
        mean = jnp.mean(z, axis=0, keepdims=True)
        var = jnp.mean((z - mean) ** 2, axis=0, keepdims=True)
        scale = g * jax.lax.rsqrt(var + BN_EPS)
        h = jnp.maximum((z - mean) * scale + bt, 0.0).astype(jnp.bfloat16)
    w, b = linear_params[-1]
    return jnp.dot(h, w.T.astype(jnp.bfloat16), preferred_element_type=jnp.float32) + b


if __name__ == "__main__":
    num_layers = 3
    input_dim = 16
    hidden_dim = 32
    output_dim = 8
    batch = 256

    key = jax.random.PRNGKey(0)
    key, kx = jax.random.split(key)
    x = jax.random.normal(kx, (batch, input_dim), jnp.float32)

    linear_params, bn_params = _init_params(key, num_layers, input_dim, hidden_dim, output_dim)

    out = mlp_forward(x, linear_params, bn_params, num_layers)
    out = jax.block_until_ready(out)
    assert out.shape == (batch, output_dim)

    # Tight check against a reference with identical numerics (bf16 MXU, f32 math).
    ref_bf16 = _reference_forward_bf16(x, linear_params, bn_params, num_layers)
    assert jnp.allclose(out, ref_bf16, atol=2e-3, rtol=2e-3), "mismatch vs bf16-numerics reference"

    # Looser check against the exact PyTorch-semantics f32 reference.
    ref_f32 = _reference_forward_f32(x, linear_params, bn_params, num_layers)
    assert jnp.allclose(out, ref_f32, atol=5e-2, rtol=5e-2), "mismatch vs f32 reference"

    print("KERNEL_OK")
</pallas_src>

<mosaic_0001>
module attributes {stable_mosaic.version = 11 : i64} {
  func.func @kernel(%arg0: memref<256x128xbf16, #tpu.memory_space<vmem>>, %arg1: memref<128x128xbf16, #tpu.memory_space<vmem>>, %arg2: memref<1x128xf32, #tpu.memory_space<vmem>>, %arg3: memref<1x128xf32, #tpu.memory_space<vmem>>, %arg4: memref<128x128xbf16, #tpu.memory_space<vmem>>, %arg5: memref<1x128xf32, #tpu.memory_space<vmem>>, %arg6: memref<1x128xf32, #tpu.memory_space<vmem>>, %arg7: memref<128x128xbf16, #tpu.memory_space<vmem>>, %arg8: memref<1x128xf32, #tpu.memory_space<vmem>>, %arg9: memref<256x128xf32, #tpu.memory_space<vmem>>) attributes {dimension_semantics = [], scalar_prefetch = 0 : i64, scratch_operands = 0 : i64, tpu.core_type = #tpu.core_type<tc>} {
    %c0 = arith.constant 0 : index
    %c0_0 = arith.constant 0 : index
    %0 = vector.load %arg0[%c0, %c0_0] : memref<256x128xbf16, #tpu.memory_space<vmem>>, vector<256x128xbf16>
    %c0_1 = arith.constant 0 : index
    %c0_2 = arith.constant 0 : index
    %1 = vector.load %arg1[%c0_1, %c0_2] : memref<128x128xbf16, #tpu.memory_space<vmem>>, vector<128x128xbf16>
    %c0_3 = arith.constant 0 : index
    %c0_4 = arith.constant 0 : index
    %2 = vector.load %arg2[%c0_3, %c0_4] : memref<1x128xf32, #tpu.memory_space<vmem>>, vector<1x128xf32>
    %c0_5 = arith.constant 0 : index
    %c0_6 = arith.constant 0 : index
    %3 = vector.load %arg3[%c0_5, %c0_6] : memref<1x128xf32, #tpu.memory_space<vmem>>, vector<1x128xf32>
    %cst = arith.constant dense<0.000000e+00> : vector<256x128xf32>
    %4 = tpu.matmul %0, %1, %cst {dimension_numbers = #tpu.dot_dimension_numbers<[1], [0], [0], [1], [0, 0, 1, 1], [], []>} : vector<256x128xbf16>, vector<128x128xbf16>, vector<256x128xf32> -> vector<256x128xf32>
    %cst_7 = arith.constant dense<0.000000e+00> : vector<128xf32>
    %5 = vector.multi_reduction <add>, %4, %cst_7 [0] : vector<256x128xf32> to vector<128xf32>
    %6 = vector.shape_cast %5 : vector<128xf32> to vector<1x128xf32>
    %cst_8 = arith.constant 3.906250e-03 : f32
    %7 = vector.broadcast %cst_8 : f32 to vector<1x128xf32>
    %8 = arith.mulf %6, %7 : vector<1x128xf32>
    %9 = vector.broadcast %8 : vector<1x128xf32> to vector<256x128xf32>
    %10 = arith.subf %4, %9 : vector<256x128xf32>
    %11 = arith.mulf %10, %10 : vector<256x128xf32>
    %cst_9 = arith.constant dense<0.000000e+00> : vector<128xf32>
    %12 = vector.multi_reduction <add>, %11, %cst_9 [0] : vector<256x128xf32> to vector<128xf32>
    %13 = vector.shape_cast %12 : vector<128xf32> to vector<1x128xf32>
    %cst_10 = arith.constant 3.906250e-03 : f32
    %14 = vector.broadcast %cst_10 : f32 to vector<1x128xf32>
    %15 = arith.mulf %13, %14 : vector<1x128xf32>
    %cst_11 = arith.constant 9.99999974E-6 : f32
    %16 = vector.broadcast %cst_11 : f32 to vector<1x128xf32>
    %17 = arith.addf %15, %16 : vector<1x128xf32>
    %18 = math.rsqrt %17 : vector<1x128xf32>
    %19 = arith.mulf %2, %18 : vector<1x128xf32>
    %20 = vector.broadcast %19 : vector<1x128xf32> to vector<256x128xf32>
    %21 = arith.mulf %10, %20 : vector<256x128xf32>
    %22 = vector.broadcast %3 : vector<1x128xf32> to vector<256x128xf32>
    %23 = arith.addf %21, %22 : vector<256x128xf32>
    %cst_12 = arith.constant 0.000000e+00 : f32
    %24 = vector.broadcast %cst_12 : f32 to vector<256x128xf32>
    %25 = arith.maximumf %23, %24 : vector<256x128xf32>
    %26 = arith.truncf %25 : vector<256x128xf32> to vector<256x128xbf16>
    %c0_13 = arith.constant 0 : index
    %c0_14 = arith.constant 0 : index
    %27 = vector.load %arg4[%c0_13, %c0_14] : memref<128x128xbf16, #tpu.memory_space<vmem>>, vector<128x128xbf16>
    %c0_15 = arith.constant 0 : index
    %c0_16 = arith.constant 0 : index
    %28 = vector.load %arg5[%c0_15, %c0_16] : memref<1x128xf32, #tpu.memory_space<vmem>>, vector<1x128xf32>
    %c0_17 = arith.constant 0 : index
    %c0_18 = arith.constant 0 : index
    %29 = vector.load %arg6[%c0_17, %c0_18] : memref<1x128xf32, #tpu.memory_space<vmem>>, vector<1x128xf32>
    %cst_19 = arith.constant dense<0.000000e+00> : vector<256x128xf32>
    %30 = tpu.matmul %26, %27, %cst_19 {dimension_numbers = #tpu.dot_dimension_numbers<[1], [0], [0], [1], [0, 0, 1, 1], [], []>} : vector<256x128xbf16>, vector<128x128xbf16>, vector<256x128xf32> -> vector<256x128xf32>
    %cst_20 = arith.constant dense<0.000000e+00> : vector<128xf32>
    %31 = vector.multi_reduction <add>, %30, %cst_20 [0] : vector<256x128xf32> to vector<128xf32>
    %32 = vector.shape_cast %31 : vector<128xf32> to vector<1x128xf32>
    %cst_21 = arith.constant 3.906250e-03 : f32
    %33 = vector.broadcast %cst_21 : f32 to vector<1x128xf32>
    %34 = arith.mulf %32, %33 : vector<1x128xf32>
    %35 = vector.broadcast %34 : vector<1x128xf32> to vector<256x128xf32>
    %36 = arith.subf %30, %35 : vector<256x128xf32>
    %37 = arith.mulf %36, %36 : vector<256x128xf32>
    %cst_22 = arith.constant dense<0.000000e+00> : vector<128xf32>
    %38 = vector.multi_reduction <add>, %37, %cst_22 [0] : vector<256x128xf32> to vector<128xf32>
    %39 = vector.shape_cast %38 : vector<128xf32> to vector<1x128xf32>
    %cst_23 = arith.constant 3.906250e-03 : f32
    %40 = vector.broadcast %cst_23 : f32 to vector<1x128xf32>
    %41 = arith.mulf %39, %40 : vector<1x128xf32>
    %cst_24 = arith.constant 9.99999974E-6 : f32
    %42 = vector.broadcast %cst_24 : f32 to vector<1x128xf32>
    %43 = arith.addf %41, %42 : vector<1x128xf32>
    %44 = math.rsqrt %43 : vector<1x128xf32>
    %45 = arith.mulf %28, %44 : vector<1x128xf32>
    %46 = vector.broadcast %45 : vector<1x128xf32> to vector<256x128xf32>
    %47 = arith.mulf %36, %46 : vector<256x128xf32>
    %48 = vector.broadcast %29 : vector<1x128xf32> to vector<256x128xf32>
    %49 = arith.addf %47, %48 : vector<256x128xf32>
    %cst_25 = arith.constant 0.000000e+00 : f32
    %50 = vector.broadcast %cst_25 : f32 to vector<256x128xf32>
    %51 = arith.maximumf %49, %50 : vector<256x128xf32>
    %52 = arith.truncf %51 : vector<256x128xf32> to vector<256x128xbf16>
    %c0_26 = arith.constant 0 : index
    %c0_27 = arith.constant 0 : index
    %53 = vector.load %arg7[%c0_26, %c0_27] : memref<128x128xbf16, #tpu.memory_space<vmem>>, vector<128x128xbf16>
    %c0_28 = arith.constant 0 : index
    %c0_29 = arith.constant 0 : index
    %54 = vector.load %arg8[%c0_28, %c0_29] : memref<1x128xf32, #tpu.memory_space<vmem>>, vector<1x128xf32>
    %cst_30 = arith.constant dense<0.000000e+00> : vector<256x128xf32>
    %55 = tpu.matmul %52, %53, %cst_30 {dimension_numbers = #tpu.dot_dimension_numbers<[1], [0], [0], [1], [0, 0, 1, 1], [], []>} : vector<256x128xbf16>, vector<128x128xbf16>, vector<256x128xf32> -> vector<256x128xf32>
    %56 = vector.broadcast %54 : vector<1x128xf32> to vector<256x128xf32>
    %57 = arith.addf %55, %56 : vector<256x128xf32>
    %c0_31 = arith.constant 0 : index
    %c0_32 = arith.constant 0 : index
    %58 = vector.load %arg9[%c0_31, %c0_32] : memref<256x128xf32, #tpu.memory_space<vmem>>, vector<256x128xf32>
    tpu.vector_store %arg9[%c0_31, %c0_32], %57 {strides = array<i32>} : memref<256x128xf32, #tpu.memory_space<vmem>>, vector<256x128xf32>,
    return
  }
}

</mosaic_0001>

<llo_original>
// kernel: tpu_custom_call.1
$region0: #{tpu_custom_call.1}
  #allocation0 [shape = 'u32[]', space=smem, size = 0x4, offset = 0x4, fixed_abs, tag = 'smem constant byte address 0x4 - core index']
  #allocation1 [shape = 'u32[72,128]{1,0:T(1,128)}', space=vmem, size = 0x9000, scoped, tag = 'internal scratch']
  %s0 = inlined_call_operand.hbm [shape: bf16[256,128], index: 0, kind: input, shape index: {}]
  %s1 = inlined_call_operand.hbm [shape: bf16[128,128], index: 1, kind: input, shape index: {}]
  %s2 = inlined_call_operand.vmem [shape: f32[1,128], index: 2, kind: input, shape index: {}]
  %s3 = inlined_call_operand.vmem [shape: f32[1,128], index: 3, kind: input, shape index: {}]
  %s4 = inlined_call_operand.hbm [shape: bf16[128,128], index: 4, kind: input, shape index: {}]
  %s5 = inlined_call_operand.vmem [shape: f32[1,128], index: 5, kind: input, shape index: {}]
  %s6 = inlined_call_operand.vmem [shape: f32[1,128], index: 6, kind: input, shape index: {}]
  %s7 = inlined_call_operand.hbm [shape: bf16[128,128], index: 7, kind: input, shape index: {}]
  %s8 = inlined_call_operand.vmem [shape: f32[1,128], index: 8, kind: input, shape index: {}]
  %s9 = inlined_call_operand.hbm [shape: f32[256,128], index: 9, kind: output, shape index: {}]
  %s10 = sld [smem:[#allocation0]]
  $region62: #{tpu_custom_call.1} parent=0
    _
  %s12 = ssub.s32 1, %s10
  %s13 = scalar_select 0, %s12, %s10
  $region1: #{tpu_custom_call.1} parent=0
    #allocation2 [shape = 'u8[65536]{0}', space=vmem, size = 0x10000, scoped, tag = 'input window, operand 0, single buffered']
    #allocation3 [shape = 's32[1]{0}', space=sflag, size = 0x4, scoped, tag = 'scoped memory for tpu_custom_call.1']
    #allocation4 [shape = 's32[1]{0}', space=sflag, size = 0x4, scoped, tag = 'scoped memory for tpu_custom_call.1']
    #allocation5 [shape = 'u8[32768]{0}', space=vmem, size = 0x8000, scoped, tag = 'input window, operand 1, single buffered']
    #allocation6 [shape = 's32[1]{0}', space=sflag, size = 0x4, scoped, tag = 'scoped memory for tpu_custom_call.1']
    #allocation7 [shape = 'u8[32768]{0}', space=vmem, size = 0x8000, scoped, tag = 'input window, operand 4, single buffered']
    #allocation8 [shape = 'u8[32768]{0}', space=vmem, size = 0x8000, scoped, tag = 'input window, operand 7, single buffered']
    #allocation9 [shape = 's32[1]{0}', space=sflag, size = 0x4, scoped, tag = 'scoped memory for tpu_custom_call.1']
    #allocation10 [shape = 'u8[131072]{0}', space=vmem, size = 0x20000, scoped, tag = 'output window, operand 0, single buffered']
    %14 = vsyncpa [#allocation3], 0
    %15 = vsyncpa [#allocation6], 0
    %16 = vsyncpa [#allocation9], 0
    %17 = vsyncpa [#allocation4], 0
    // Predicated region
    $region2: #{tpu_custom_call.1} parent=1 // pred_check
      _
    $region3: #{tpu_custom_call.1} parent=1 // pred_check_branch
      %19 = sbr.rel (0) target = $region5
    $region4: #{tpu_custom_call.1} parent=1 // pred_region
      %21 = vsyncadd [#allocation3], 0
      %s22 = sshll.u32 %s0, 4
      %s23 = int_to_ptr.hbm [resolvable:$true] %s22
      %s24 = sshll.u32 [#allocation2], 4
      %s25 = int_to_ptr.vmem [resolvable:$true] %s24
      %30 = dma.hbm_to_vmem [thread:$0]  %s23, 2048, %s25, [#allocation3], 64, 64, 4
    $region5: #{tpu_custom_call.1} parent=1 // pred_fallthru
      _
    // Predicated region
    $region6: #{tpu_custom_call.1} parent=1 // pred_check
      _
    $region7: #{tpu_custom_call.1} parent=1 // pred_check_branch
      %32 = sbr.rel (0) target = $region9
    $region8: #{tpu_custom_call.1} parent=1 // pred_region
      %34 = vsyncadd [#allocation6], 0
      %s35 = sshll.u32 %s1, 4
      %s36 = int_to_ptr.hbm [resolvable:$true] %s35
      %s37 = sshll.u32 [#allocation5], 4
      %s38 = int_to_ptr.vmem [resolvable:$true] %s37
      %43 = dma.hbm_to_vmem [thread:$0]  %s36, 1024, %s38, [#allocation6], 64, 64, 4
    $region9: #{tpu_custom_call.1} parent=1 // pred_fallthru
      _
    // Predicated region
    $region10: #{tpu_custom_call.1} parent=1 // pred_check
      _
    $region11: #{tpu_custom_call.1} parent=1 // pred_check_branch
      %45 = sbr.rel (0) target = $region13
    $region12: #{tpu_custom_call.1} parent=1 // pred_region
      _
    $region13: #{tpu_custom_call.1} parent=1 // pred_fallthru
      _
    // Predicated region
    $region14: #{tpu_custom_call.1} parent=1 // pred_check
      _
    $region15: #{tpu_custom_call.1} parent=1 // pred_check_branch
      %47 = sbr.rel (0) target = $region17
    $region16: #{tpu_custom_call.1} parent=1 // pred_region
      _
    $region17: #{tpu_custom_call.1} parent=1 // pred_fallthru
      _
    // Predicated region
    $region18: #{tpu_custom_call.1} parent=1 // pred_check
      _
    $region19: #{tpu_custom_call.1} parent=1 // pred_check_branch
      %49 = sbr.rel (0) target = $region21
    $region20: #{tpu_custom_call.1} parent=1 // pred_region
      %51 = vsyncadd [#allocation6], 0
      %s52 = sshll.u32 %s4, 4
      %s53 = int_to_ptr.hbm [resolvable:$true] %s52
      %s54 = sshll.u32 [#allocation7], 4
      %s55 = int_to_ptr.vmem [resolvable:$true] %s54
      %60 = dma.hbm_to_vmem [thread:$0]  %s53, 1024, %s55, [#allocation6], 64, 64, 4
    $region21: #{tpu_custom_call.1} parent=1 // pred_fallthru
      _
    // Predicated region
    $region22: #{tpu_custom_call.1} parent=1 // pred_check
      _
    $region23: #{tpu_custom_call.1} parent=1 // pred_check_branch
      %62 = sbr.rel (0) target = $region25
    $region24: #{tpu_custom_call.1} parent=1 // pred_region
      _
    $region25: #{tpu_custom_call.1} parent=1 // pred_fallthru
      _
    // Predicated region
    $region26: #{tpu_custom_call.1} parent=1 // pred_check
      _
    $region27: #{tpu_custom_call.1} parent=1 // pred_check_branch
      %64 = sbr.rel (0) target = $region29
    $region28: #{tpu_custom_call.1} parent=1 // pred_region
      _
    $region29: #{tpu_custom_call.1} parent=1 // pred_fallthru
      _
    // Predicated region
    $region30: #{tpu_custom_call.1} parent=1 // pred_check
      _
    $region31: #{tpu_custom_call.1} parent=1 // pred_check_branch
      %66 = sbr.rel (0) target = $region33
    $region32: #{tpu_custom_call.1} parent=1 // pred_region
      %68 = vsyncadd [#allocation9], 0
      %s69 = sshll.u32 %s7, 4
      %s70 = int_to_ptr.hbm [resolvable:$true] %s69
      %s71 = sshll.u32 [#allocation8], 4
      %s72 = int_to_ptr.vmem [resolvable:$true] %s71
      %77 = dma.hbm_to_vmem [thread:$0]  %s70, 1024, %s72, [#allocation9], 64, 64, 4
    $region33: #{tpu_custom_call.1} parent=1 // pred_fallthru
      _
    // Predicated region
    $region34: #{tpu_custom_call.1} parent=1 // pred_check
      _
    $region35: #{tpu_custom_call.1} parent=1 // pred_check_branch
      %79 = sbr.rel (0) target = $region37
    $region36: #{tpu_custom_call.1} parent=1 // pred_region
      _
    $region37: #{tpu_custom_call.1} parent=1 // pred_fallthru
      _
    // Predicated region
    $region38: #{tpu_custom_call.1} parent=1 // pred_check
      _
    $region39: #{tpu_custom_call.1} parent=1 // pred_check_branch
      %81 = sbr.rel (0) target = $region41
    $region40: #{tpu_custom_call.1} parent=1 // pred_region
      %83 = dma.done [#allocation3], 2048
    $region41: #{tpu_custom_call.1} parent=1 // pred_fallthru
      _
    // Predicated region
    $region42: #{tpu_custom_call.1} parent=1 // pred_check
      _
    $region43: #{tpu_custom_call.1} parent=1 // pred_check_branch
      %85 = sbr.rel (0) target = $region45
    $region44: #{tpu_custom_call.1} parent=1 // pred_region
      %87 = dma.done [#allocation6], 1024
    $region45: #{tpu_custom_call.1} parent=1 // pred_fallthru
      _
    // Predicated region
    $region46: #{tpu_custom_call.1} parent=1 // pred_check
      _
    $region47: #{tpu_custom_call.1} parent=1 // pred_check_branch
      %89 = sbr.rel (0) target = $region49
    $region48: #{tpu_custom_call.1} parent=1 // pred_region
      %91 = dma.done [#allocation6], 1024
    $region49: #{tpu_custom_call.1} parent=1 // pred_fallthru
      _
    // Predicated region
    $region50: #{tpu_custom_call.1} parent=1 // pred_check
      _
    $region51: #{tpu_custom_call.1} parent=1 // pred_check_branch
      %93 = sbr.rel (0) target = $region53
    $region52: #{tpu_custom_call.1} parent=1 // pred_region
      %95 = dma.done [#allocation9], 1024
    $region53: #{tpu_custom_call.1} parent=1 // pred_fallthru
      _
    %v96 = vld [vmem:[#allocation2] sm:$0xf]
    %v97 = vld [vmem:[#allocation2 + $0x4] sm:$0xf]
    %v98 = vld [vmem:[#allocation2 + $0x8] sm:$0xf]
    %v99 = vld [vmem:[#allocation2 + $0xc] sm:$0xf]
    %v100 = vld [vmem:[#allocation2 + $0x10] sm:$0xf]
    %v101 = vld [vmem:[#allocation2 + $0x14] sm:$0xf]
    %v102 = vld [vmem:[#allocation2 + $0x18] sm:$0xf]
    %v103 = vld [vmem:[#allocation2 + $0x1c] sm:$0xf]
    %v104 = vld [vmem:[#allocation2 + $0x20] sm:$0xf]
    %v105 = vld [vmem:[#allocation2 + $0x24] sm:$0xf]
    %v106 = vld [vmem:[#allocation2 + $0x28] sm:$0xf]
    %v107 = vld [vmem:[#allocation2 + $0x2c] sm:$0xf]
    %v108 = vld [vmem:[#allocation2 + $0x30] sm:$0xf]
    %v109 = vld [vmem:[#allocation2 + $0x34] sm:$0xf]
    %v110 = vld [vmem:[#allocation2 + $0x38] sm:$0xf]
    %v111 = vld [vmem:[#allocation2 + $0x3c] sm:$0xf]
    %v112 = vld [vmem:[#allocation2 + $0x40] sm:$0xf]
    %v113 = vld [vmem:[#allocation2 + $0x44] sm:$0xf]
    %v114 = vld [vmem:[#allocation2 + $0x48] sm:$0xf]
    %v115 = vld [vmem:[#allocation2 + $0x4c] sm:$0xf]
    %v116 = vld [vmem:[#allocation2 + $0x50] sm:$0xf]
    %v117 = vld [vmem:[#allocation2 + $0x54] sm:$0xf]
    %v118 = vld [vmem:[#allocation2 + $0x58] sm:$0xf]
    %v119 = vld [vmem:[#allocation2 + $0x5c] sm:$0xf]
    %v120 = vld [vmem:[#allocation2 + $0x60] sm:$0xf]
    %v121 = vld [vmem:[#allocation2 + $0x64] sm:$0xf]
    %v122 = vld [vmem:[#allocation2 + $0x68] sm:$0xf]
    %v123 = vld [vmem:[#allocation2 + $0x6c] sm:$0xf]
    %v124 = vld [vmem:[#allocation2 + $0x70] sm:$0xf]
    %v125 = vld [vmem:[#allocation2 + $0x74] sm:$0xf]
    %v126 = vld [vmem:[#allocation2 + $0x78] sm:$0xf]
    %v127 = vld [vmem:[#allocation2 + $0x7c] sm:$0xf]
    %v128 = vld [vmem:[#allocation5] sm:$0xf]
    %v129 = vld [vmem:[#allocation5 + $0x4] sm:$0xf]
    %v130 = vld [vmem:[#allocation5 + $0x8] sm:$0xf]
    %v131 = vld [vmem:[#allocation5 + $0xc] sm:$0xf]
    %v132 = vld [vmem:[#allocation5 + $0x10] sm:$0xf]
    %v133 = vld [vmem:[#allocation5 + $0x14] sm:$0xf]
    %v134 = vld [vmem:[#allocation5 + $0x18] sm:$0xf]
    %v135 = vld [vmem:[#allocation5 + $0x1c] sm:$0xf]
    %v136 = vld [vmem:[#allocation5 + $0x20] sm:$0xf]
    %v137 = vld [vmem:[#allocation5 + $0x24] sm:$0xf]
    %v138 = vld [vmem:[#allocation5 + $0x28] sm:$0xf]
    %v139 = vld [vmem:[#allocation5 + $0x2c] sm:$0xf]
    %v140 = vld [vmem:[#allocation5 + $0x30] sm:$0xf]
    %v141 = vld [vmem:[#allocation5 + $0x34] sm:$0xf]
    %v142 = vld [vmem:[#allocation5 + $0x38] sm:$0xf]
    %v143 = vld [vmem:[#allocation5 + $0x3c] sm:$0xf]
    %v144 = vld [vmem:[%s2] sm:$0x1]
    %v145 = vld [vmem:[%s3] sm:$0x1]
    %v178 = vunpack.c.l.b16 %v96
    %v179 = vunpack.c.l.b16 %v97
    %v180 = vunpack.c.l.b16 %v98
    %v181 = vunpack.c.l.b16 %v99
    %v182 = vunpack.c.l.b16 %v100
    %v183 = vunpack.c.l.b16 %v101
    %v184 = vunpack.c.l.b16 %v102
    %v185 = vunpack.c.l.b16 %v103
    %v186 = vunpack.c.l.b16 %v104
    %v187 = vunpack.c.l.b16 %v105
    %v188 = vunpack.c.l.b16 %v106
    %v189 = vunpack.c.l.b16 %v107
    %v190 = vunpack.c.l.b16 %v108
    %v191 = vunpack.c.l.b16 %v109
    %v192 = vunpack.c.l.b16 %v110
    %v193 = vunpack.c.l.b16 %v111
    %v194 = vunpack.c.l.b16 %v112
    %v195 = vunpack.c.l.b16 %v113
    %v196 = vunpack.c.l.b16 %v114
    %v197 = vunpack.c.l.b16 %v115
    %v198 = vunpack.c.l.b16 %v116
    %v199 = vunpack.c.l.b16 %v117
    %v200 = vunpack.c.l.b16 %v118
    %v201 = vunpack.c.l.b16 %v119
    %v202 = vunpack.c.l.b16 %v120
    %v203 = vunpack.c.l.b16 %v121
    %v204 = vunpack.c.l.b16 %v122
    %v205 = vunpack.c.l.b16 %v123
    %v206 = vunpack.c.l.b16 %v124
    %v207 = vunpack.c.l.b16 %v125
    %v208 = vunpack.c.l.b16 %v126
    %v209 = vunpack.c.l.b16 %v127
    %v210 = vpack.c.b16 %v179, %v178
    %v211 = vpack.c.b16 %v181, %v180
    %v212 = vpack.c.b16 %v183, %v182
    %v213 = vpack.c.b16 %v185, %v184
    %v214 = vpack.c.b16 %v187, %v186
    %v215 = vpack.c.b16 %v189, %v188
    %v216 = vpack.c.b16 %v191, %v190
    %v217 = vpack.c.b16 %v193, %v192
    %v218 = vpack.c.b16 %v195, %v194
    %v219 = vpack.c.b16 %v197, %v196
    %v220 = vpack.c.b16 %v199, %v198
    %v221 = vpack.c.b16 %v201, %v200
    %v222 = vpack.c.b16 %v203, %v202
    %v223 = vpack.c.b16 %v205, %v204
    %v224 = vpack.c.b16 %v207, %v206
    %v225 = vpack.c.b16 %v209, %v208
    %v258 = vunpack.c.l.b16 %v128
    %v259 = vunpack.c.l.b16 %v129
    %v260 = vunpack.c.l.b16 %v130
    %v261 = vunpack.c.l.b16 %v131
    %v262 = vunpack.c.l.b16 %v132
    %v263 = vunpack.c.l.b16 %v133
    %v264 = vunpack.c.l.b16 %v134
    %v265 = vunpack.c.l.b16 %v135
    %v266 = vunpack.c.l.b16 %v136
    %v267 = vunpack.c.l.b16 %v137
    %v268 = vunpack.c.l.b16 %v138
    %v269 = vunpack.c.l.b16 %v139
    %v270 = vunpack.c.l.b16 %v140
    %v271 = vunpack.c.l.b16 %v141
    %v272 = vunpack.c.l.b16 %v142
    %v273 = vunpack.c.l.b16 %v143
    %v274 = vpack.c.b16 %v259, %v258
    %v275 = vpack.c.b16 %v261, %v260
    %v276 = vpack.c.b16 %v263, %v262
    %v277 = vpack.c.b16 %v265, %v264
    %v278 = vpack.c.b16 %v267, %v266
    %v279 = vpack.c.b16 %v269, %v268
    %v280 = vpack.c.b16 %v271, %v270
    %v281 = vpack.c.b16 %v273, %v272
    %290 = vmatpush.bf16.msra.mxu0 %v281
    %291 = vmatpush.bf16.msra.mxu0 %v280
    %292 = vmatpush.bf16.msra.mxu0 %v279
    %293 = vmatpush.bf16.msra.mxu0 %v278
    %294 = vmatpush.bf16.msra.mxu0 %v277
    %295 = vmatpush.bf16.msra.mxu0 %v276
    %296 = vmatpush.bf16.msra.mxu0 %v275
    %297 = vmatpush.bf16.msra.mxu0 %v274
    %298 = vmatmul.bf16.gmra.mxu0 %v210
    %v299 = vpop.f32.mrf.mxu0
    %v300 = vadd.f32 0.0, %v299
    %v301 = vpop.f32.mrf.mxu0
    %v302 = vadd.f32 0.0, %v301
    %303 = vmatmul.bf16.gmra.mxu0 %v211
    %v304 = vpop.f32.mrf.mxu0
    %v305 = vadd.f32 0.0, %v304
    %v306 = vpop.f32.mrf.mxu0
    %v307 = vadd.f32 0.0, %v306
    %308 = vmatmul.bf16.gmra.mxu0 %v212
    %v309 = vpop.f32.mrf.mxu0
    %v310 = vadd.f32 0.0, %v309
    %v311 = vpop.f32.mrf.mxu0
    %v312 = vadd.f32 0.0, %v311
    %313 = vmatmul.bf16.gmra.mxu0 %v213
    %v314 = vpop.f32.mrf.mxu0
    %v315 = vadd.f32 0.0, %v314
    %v316 = vpop.f32.mrf.mxu0
    %v317 = vadd.f32 0.0, %v316
    %318 = vmatmul.bf16.gmra.mxu0 %v214
    %v319 = vpop.f32.mrf.mxu0
    %v320 = vadd.f32 0.0, %v319
    %v321 = vpop.f32.mrf.mxu0
    %v322 = vadd.f32 0.0, %v321
    %323 = vmatmul.bf16.gmra.mxu0 %v215
    %v324 = vpop.f32.mrf.mxu0
    %v325 = vadd.f32 0.0, %v324
    %v326 = vpop.f32.mrf.mxu0
    %v327 = vadd.f32 0.0, %v326
    %328 = vmatmul.bf16.gmra.mxu0 %v216
    %v329 = vpop.f32.mrf.mxu0
    %v330 = vadd.f32 0.0, %v329
    %v331 = vpop.f32.mrf.mxu0
    %v332 = vadd.f32 0.0, %v331
    %333 = vmatmul.bf16.gmra.mxu0 %v217
    %v334 = vpop.f32.mrf.mxu0
    %v335 = vadd.f32 0.0, %v334
    %v336 = vpop.f32.mrf.mxu0
    %v337 = vadd.f32 0.0, %v336
    %338 = vmatmul.bf16.gmra.mxu0 %v218
    %v339 = vpop.f32.mrf.mxu0
    %v340 = vadd.f32 0.0, %v339
    %v341 = vpop.f32.mrf.mxu0
    %v342 = vadd.f32 0.0, %v341
    %343 = vmatmul.bf16.gmra.mxu0 %v219
    %v344 = vpop.f32.mrf.mxu0
    %v345 = vadd.f32 0.0, %v344
    %v346 = vpop.f32.mrf.mxu0
    %v347 = vadd.f32 0.0, %v346
    %348 = vmatmul.bf16.gmra.mxu0 %v220
    %v349 = vpop.f32.mrf.mxu0
    %v350 = vadd.f32 0.0, %v349
    %v351 = vpop.f32.mrf.mxu0
    %v352 = vadd.f32 0.0, %v351
    %353 = vmatmul.bf16.gmra.mxu0 %v221
    %v354 = vpop.f32.mrf.mxu0
    %v355 = vadd.f32 0.0, %v354
    %v356 = vpop.f32.mrf.mxu0
    %v357 = vadd.f32 0.0, %v356
    %358 = vmatmul.bf16.gmra.mxu0 %v222
    %v359 = vpop.f32.mrf.mxu0
    %v360 = vadd.f32 0.0, %v359
    %v361 = vpop.f32.mrf.mxu0
    %v362 = vadd.f32 0.0, %v361
    %363 = vmatmul.bf16.gmra.mxu0 %v223
    %v364 = vpop.f32.mrf.mxu0
    %v365 = vadd.f32 0.0, %v364
    %v366 = vpop.f32.mrf.mxu0
    %v367 = vadd.f32 0.0, %v366
    %368 = vmatmul.bf16.gmra.mxu0 %v224
    %v369 = vpop.f32.mrf.mxu0
    %v370 = vadd.f32 0.0, %v369
    %v371 = vpop.f32.mrf.mxu0
    %v372 = vadd.f32 0.0, %v371
    %373 = vmatmul.bf16.gmra.mxu0 %v225
    %v374 = vpop.f32.mrf.mxu0
    %v375 = vadd.f32 0.0, %v374
    %v376 = vpop.f32.mrf.mxu0
    %v377 = vadd.f32 0.0, %v376
    %378 = vdwg.mxu0
    %v379 = vadd.f32 %v300, %v302
    %v380 = vadd.f32 %v379, %v305
    %v381 = vadd.f32 %v380, %v307
    %v382 = vadd.f32 %v381, %v310
    %v383 = vadd.f32 %v382, %v312
    %v384 = vadd.f32 %v383, %v315
    %v385 = vadd.f32 %v384, %v317
    %v386 = vadd.f32 %v385, %v320
    %v387 = vadd.f32 %v386, %v322
    %v388 = vadd.f32 %v387, %v325
    %v389 = vadd.f32 %v388, %v327
    %v390 = vadd.f32 %v389, %v330
    %v391 = vadd.f32 %v390, %v332
    %v392 = vadd.f32 %v391, %v335
    %v393 = vadd.f32 %v392, %v337
    %v394 = vadd.f32 %v393, %v340
    %v395 = vadd.f32 %v394, %v342
    %v396 = vadd.f32 %v395, %v345
    %v397 = vadd.f32 %v396, %v347
    %v398 = vadd.f32 %v397, %v350
    %v399 = vadd.f32 %v398, %v352
    %v400 = vadd.f32 %v399, %v355
    %v401 = vadd.f32 %v400, %v357
    %v402 = vadd.f32 %v401, %v360
    %v403 = vadd.f32 %v402, %v362
    %v404 = vadd.f32 %v403, %v365
    %v405 = vadd.f32 %v404, %v367
    %v406 = vadd.f32 %v405, %v370
    %v407 = vadd.f32 %v406, %v372
    %v408 = vadd.f32 %v407, %v375
    %v409 = vadd.f32 %v408, %v377
    %v410 = vrot.slane %v409, 4
    %v411 = vadd.f32 %v409, %v410
    %v412 = vrot.slane %v411, 2
    %v413 = vadd.f32 %v411, %v412
    %v414 = vrot.slane %v413, 1
    %v415 = vadd.f32 %v413, %v414
    %v416 = vmul.f32 %v415, 0.00390625
    %v417 = vsub.f32 %v300, %v416
    %v418 = vsub.f32 %v302, %v416
    %v419 = vsub.f32 %v305, %v416
    %v420 = vsub.f32 %v307, %v416
    %v421 = vsub.f32 %v310, %v416
    %v422 = vsub.f32 %v312, %v416
    %v423 = vsub.f32 %v315, %v416
    %v424 = vsub.f32 %v317, %v416
    %v425 = vsub.f32 %v320, %v416
    %v426 = vsub.f32 %v322, %v416
    %v427 = vsub.f32 %v325, %v416
    %v428 = vsub.f32 %v327, %v416
    %v429 = vsub.f32 %v330, %v416
    %v430 = vsub.f32 %v332, %v416
    %v431 = vsub.f32 %v335, %v416
    %v432 = vsub.f32 %v337, %v416
    %v433 = vsub.f32 %v340, %v416
    %v434 = vsub.f32 %v342, %v416
    %v435 = vsub.f32 %v345, %v416
    %v436 = vsub.f32 %v347, %v416
    %v437 = vsub.f32 %v350, %v416
    %v438 = vsub.f32 %v352, %v416
    %v439 = vsub.f32 %v355, %v416
    %v440 = vsub.f32 %v357, %v416
    %v441 = vsub.f32 %v360, %v416
    %v442 = vsub.f32 %v362, %v416
    %v443 = vsub.f32 %v365, %v416
    %v444 = vsub.f32 %v367, %v416
    %v445 = vsub.f32 %v370, %v416
    %v446 = vsub.f32 %v372, %v416
    %v447 = vsub.f32 %v375, %v416
    %v448 = vsub.f32 %v377, %v416
    %v449 = vmul.f32 %v417, %v417
    %v450 = vmul.f32 %v418, %v418
    %v451 = vmul.f32 %v419, %v419
    %v452 = vmul.f32 %v420, %v420
    %v453 = vmul.f32 %v421, %v421
    %v454 = vmul.f32 %v422, %v422
    %v455 = vmul.f32 %v423, %v423
    %v456 = vmul.f32 %v424, %v424
    %v457 = vmul.f32 %v425, %v425
    %v458 = vmul.f32 %v426, %v426
    %v459 = vmul.f32 %v427, %v427
    %v460 = vmul.f32 %v428, %v428
    %v461 = vmul.f32 %v429, %v429
    %v462 = vmul.f32 %v430, %v430
    %v463 = vmul.f32 %v431, %v431
    %v464 = vmul.f32 %v432, %v432
    %v465 = vmul.f32 %v433, %v433
    %v466 = vmul.f32 %v434, %v434
    %v467 = vmul.f32 %v435, %v435
    %v468 = vmul.f32 %v436, %v436
    %v469 = vmul.f32 %v437, %v437
    %v470 = vmul.f32 %v438, %v438
    %v471 = vmul.f32 %v439, %v439
    %v472 = vmul.f32 %v440, %v440
    %v473 = vmul.f32 %v441, %v441
    %v474 = vmul.f32 %v442, %v442
    %v475 = vmul.f32 %v443, %v443
    %v476 = vmul.f32 %v444, %v444
    %v477 = vmul.f32 %v445, %v445
    %v478 = vmul.f32 %v446, %v446
    %v479 = vmul.f32 %v447, %v447
    %v480 = vmul.f32 %v448, %v448
    %v481 = vadd.f32 %v449, %v450
    %v482 = vadd.f32 %v481, %v451
    %v483 = vadd.f32 %v482, %v452
    %v484 = vadd.f32 %v483, %v453
    %v485 = vadd.f32 %v484, %v454
    %v486 = vadd.f32 %v485, %v455
    %v487 = vadd.f32 %v486, %v456
    %v488 = vadd.f32 %v487, %v457
    %v489 = vadd.f32 %v488, %v458
    %v490 = vadd.f32 %v489, %v459
    %v491 = vadd.f32 %v490, %v460
    %v492 = vadd.f32 %v491, %v461
    %v493 = vadd.f32 %v492, %v462
    %v494 = vadd.f32 %v493, %v463
    %v495 = vadd.f32 %v494, %v464
    %v496 = vadd.f32 %v495, %v465
    %v497 = vadd.f32 %v496, %v466
    %v498 = vadd.f32 %v497, %v467
    %v499 = vadd.f32 %v498, %v468
    %v500 = vadd.f32 %v499, %v469
    %v501 = vadd.f32 %v500, %v470
    %v502 = vadd.f32 %v501, %v471
    %v503 = vadd.f32 %v502, %v472
    %v504 = vadd.f32 %v503, %v473
    %v505 = vadd.f32 %v504, %v474
    %v506 = vadd.f32 %v505, %v475
    %v507 = vadd.f32 %v506, %v476
    %v508 = vadd.f32 %v507, %v477
    %v509 = vadd.f32 %v508, %v478
    %v510 = vadd.f32 %v509, %v479
    %v511 = vadd.f32 %v510, %v480
    %v512 = vrot.slane %v511, 4
    %v513 = vadd.f32 %v511, %v512
    %v514 = vrot.slane %v513, 2
    %v515 = vadd.f32 %v513, %v514
    %v516 = vrot.slane %v515, 1
    %v517 = vadd.f32 %v515, %v516
    %v518 = vmul.f32 %v517, 0.00390625
    %v519 = vadd.f32 %v518, 1e-05
    %v520 = vrsqrt.pop %v519
    %v521 = vmul.f32 %v520, %v519
    %v522 = vmul.f32 %v521, %v520
    %v523 = vmul.f32 0.5, %v522
    %v524 = vsub.f32 1.5, %v523
    %v525 = vmul.f32 %v520, %v524
    %vm526 = vweird.f32 %v519
    %vm527 = vweird.f32 %v520
    %vm528 = vmor %vm526, %vm527
    %v529 = vsel %vm528, %v520, %v525
    %v530 = vmul.f32 %v144, %v529
    %v532 = vperm.slane %v530, 0
    %v534 = vmul.f32 %v417, %v532
    %v535 = vmul.f32 %v418, %v532
    %v536 = vmul.f32 %v419, %v532
    %v537 = vmul.f32 %v420, %v532
    %v538 = vmul.f32 %v421, %v532
    %v539 = vmul.f32 %v422, %v532
    %v540 = vmul.f32 %v423, %v532
    %v541 = vmul.f32 %v424, %v532
    %v542 = vmul.f32 %v425, %v532
    %v543 = vmul.f32 %v426, %v532
    %v544 = vmul.f32 %v427, %v532
    %v545 = vmul.f32 %v428, %v532
    %v546 = vmul.f32 %v429, %v532
    %v547 = vmul.f32 %v430, %v532
    %v548 = vmul.f32 %v431, %v532
    %v549 = vmul.f32 %v432, %v532
    %v550 = vmul.f32 %v433, %v532
    %v551 = vmul.f32 %v434, %v532
    %v552 = vmul.f32 %v435, %v532
    %v553 = vmul.f32 %v436, %v532
    %v554 = vmul.f32 %v437, %v532
    %v555 = vmul.f32 %v438, %v532
    %v556 = vmul.f32 %v439, %v532
    %v557 = vmul.f32 %v440, %v532
    %v558 = vmul.f32 %v441, %v532
    %v559 = vmul.f32 %v442, %v532
    %v560 = vmul.f32 %v443, %v532
    %v561 = vmul.f32 %v444, %v532
    %v562 = vmul.f32 %v445, %v532
    %v563 = vmul.f32 %v446, %v532
    %v564 = vmul.f32 %v447, %v532
    %v565 = vmul.f32 %v448, %v532
    %v567 = vperm.slane %v145, 0
    %v569 = vadd.f32 %v534, %v567
    %v570 = vadd.f32 %v535, %v567
    %v571 = vadd.f32 %v536, %v567
    %v572 = vadd.f32 %v537, %v567
    %v573 = vadd.f32 %v538, %v567
    %v574 = vadd.f32 %v539, %v567
    %v575 = vadd.f32 %v540, %v567
    %v576 = vadd.f32 %v541, %v567
    %v577 = vadd.f32 %v542, %v567
    %v578 = vadd.f32 %v543, %v567
    %v579 = vadd.f32 %v544, %v567
    %v580 = vadd.f32 %v545, %v567
    %v581 = vadd.f32 %v546, %v567
    %v582 = vadd.f32 %v547, %v567
    %v583 = vadd.f32 %v548, %v567
    %v584 = vadd.f32 %v549, %v567
    %v585 = vadd.f32 %v550, %v567
    %v586 = vadd.f32 %v551, %v567
    %v587 = vadd.f32 %v552, %v567
    %v588 = vadd.f32 %v553, %v567
    %v589 = vadd.f32 %v554, %v567
    %v590 = vadd.f32 %v555, %v567
    %v591 = vadd.f32 %v556, %v567
    %v592 = vadd.f32 %v557, %v567
    %v593 = vadd.f32 %v558, %v567
    %v594 = vadd.f32 %v559, %v567
    %v595 = vadd.f32 %v560, %v567
    %v596 = vadd.f32 %v561, %v567
    %v597 = vadd.f32 %v562, %v567
    %v598 = vadd.f32 %v563, %v567
    %v599 = vadd.f32 %v564, %v567
    %v600 = vadd.f32 %v565, %v567
    %v601 = vmax.f32 %v569, 0.0
    %v602 = vmax.f32 %v570, 0.0
    %v603 = vmax.f32 %v571, 0.0
    %v604 = vmax.f32 %v572, 0.0
    %v605 = vmax.f32 %v573, 0.0
    %v606 = vmax.f32 %v574, 0.0
    %v607 = vmax.f32 %v575, 0.0
    %v608 = vmax.f32 %v576, 0.0
    %v609 = vmax.f32 %v577, 0.0
    %v610 = vmax.f32 %v578, 0.0
    %v611 = vmax.f32 %v579, 0.0
    %v612 = vmax.f32 %v580, 0.0
    %v613 = vmax.f32 %v581, 0.0
    %v614 = vmax.f32 %v582, 0.0
    %v615 = vmax.f32 %v583, 0.0
    %v616 = vmax.f32 %v584, 0.0
    %v617 = vmax.f32 %v585, 0.0
    %v618 = vmax.f32 %v586, 0.0
    %v619 = vmax.f32 %v587, 0.0
    %v620 = vmax.f32 %v588, 0.0
    %v621 = vmax.f32 %v589, 0.0
    %v622 = vmax.f32 %v590, 0.0
    %v623 = vmax.f32 %v591, 0.0
    %v624 = vmax.f32 %v592, 0.0
    %v625 = vmax.f32 %v593, 0.0
    %v626 = vmax.f32 %v594, 0.0
    %v627 = vmax.f32 %v595, 0.0
    %v628 = vmax.f32 %v596, 0.0
    %v629 = vmax.f32 %v597, 0.0
    %v630 = vmax.f32 %v598, 0.0
    %v631 = vmax.f32 %v599, 0.0
    %v632 = vmax.f32 %v600, 0.0
    %v633 = vpack.c.bf16 %v602, %v601
    %v634 = vpack.c.bf16 %v604, %v603
    %v635 = vpack.c.bf16 %v606, %v605
    %v636 = vpack.c.bf16 %v608, %v607
    %v637 = vpack.c.bf16 %v610, %v609
    %v638 = vpack.c.bf16 %v612, %v611
    %v639 = vpack.c.bf16 %v614, %v613
    %v640 = vpack.c.bf16 %v616, %v615
    %v641 = vpack.c.bf16 %v618, %v617
    %v642 = vpack.c.bf16 %v620, %v619
    %v643 = vpack.c.bf16 %v622, %v621
    %v644 = vpack.c.bf16 %v624, %v623
    %v645 = vpack.c.bf16 %v626, %v625
    %v646 = vpack.c.bf16 %v628, %v627
    %v647 = vpack.c.bf16 %v630, %v629
    %v648 = vpack.c.bf16 %v632, %v631
    %v649 = vld [vmem:[#allocation7] sm:$0xf]
    %v650 = vld [vmem:[#allocation7 + $0x4] sm:$0xf]
    %v651 = vld [vmem:[#allocation7 + $0x8] sm:$0xf]
    %v652 = vld [vmem:[#allocation7 + $0xc] sm:$0xf]
    %v653 = vld [vmem:[#allocation7 + $0x10] sm:$0xf]
    %v654 = vld [vmem:[#allocation7 + $0x14] sm:$0xf]
    %v655 = vld [vmem:[#allocation7 + $0x18] sm:$0xf]
    %v656 = vld [vmem:[#allocation7 + $0x1c] sm:$0xf]
    %v657 = vld [vmem:[#allocation7 + $0x20] sm:$0xf]
    %v658 = vld [vmem:[#allocation7 + $0x24] sm:$0xf]
    %v659 = vld [vmem:[#allocation7 + $0x28] sm:$0xf]
    %v660 = vld [vmem:[#allocation7 + $0x2c] sm:$0xf]
    %v661 = vld [vmem:[#allocation7 + $0x30] sm:$0xf]
    %v662 = vld [vmem:[#allocation7 + $0x34] sm:$0xf]
    %v663 = vld [vmem:[#allocation7 + $0x38] sm:$0xf]
    %v664 = vld [vmem:[#allocation7 + $0x3c] sm:$0xf]
    %v665 = vld [vmem:[%s5] sm:$0x1]
    %v666 = vld [vmem:[%s6] sm:$0x1]
    %v683 = vunpack.c.l.b16 %v649
    %v684 = vunpack.c.l.b16 %v650
    %v685 = vunpack.c.l.b16 %v651
    %v686 = vunpack.c.l.b16 %v652
    %v687 = vunpack.c.l.b16 %v653
    %v688 = vunpack.c.l.b16 %v654
    %v689 = vunpack.c.l.b16 %v655
    %v690 = vunpack.c.l.b16 %v656
    %v691 = vunpack.c.l.b16 %v657
    %v692 = vunpack.c.l.b16 %v658
    %v693 = vunpack.c.l.b16 %v659
    %v694 = vunpack.c.l.b16 %v660
    %v695 = vunpack.c.l.b16 %v661
    %v696 = vunpack.c.l.b16 %v662
    %v697 = vunpack.c.l.b16 %v663
    %v698 = vunpack.c.l.b16 %v664
    %v699 = vpack.c.b16 %v684, %v683
    %v700 = vpack.c.b16 %v686, %v685
    %v701 = vpack.c.b16 %v688, %v687
    %v702 = vpack.c.b16 %v690, %v689
    %v703 = vpack.c.b16 %v692, %v691
    %v704 = vpack.c.b16 %v694, %v693
    %v705 = vpack.c.b16 %v696, %v695
    %v706 = vpack.c.b16 %v698, %v697
    %715 = vmatpush.bf16.msra.mxu0 %v706
    %716 = vmatpush.bf16.msra.mxu0 %v705
    %717 = vmatpush.bf16.msra.mxu0 %v704
    %718 = vmatpush.bf16.msra.mxu0 %v703
    %719 = vmatpush.bf16.msra.mxu0 %v702
    %720 = vmatpush.bf16.msra.mxu0 %v701
    %721 = vmatpush.bf16.msra.mxu0 %v700
    %722 = vmatpush.bf16.msra.mxu0 %v699
    %723 = vmatmul.bf16.gmra.mxu0 %v633
    %v724 = vpop.f32.mrf.mxu0
    %v725 = vadd.f32 0.0, %v724
    %v726 = vpop.f32.mrf.mxu0
    %v727 = vadd.f32 0.0, %v726
    %728 = vmatmul.bf16.gmra.mxu0 %v634
    %v729 = vpop.f32.mrf.mxu0
    %v730 = vadd.f32 0.0, %v729
    %v731 = vpop.f32.mrf.mxu0
    %v732 = vadd.f32 0.0, %v731
    %733 = vmatmul.bf16.gmra.mxu0 %v635
    %v734 = vpop.f32.mrf.mxu0
    %v735 = vadd.f32 0.0, %v734
    %v736 = vpop.f32.mrf.mxu0
    %v737 = vadd.f32 0.0, %v736
    %738 = vmatmul.bf16.gmra.mxu0 %v636
    %v739 = vpop.f32.mrf.mxu0
    %v740 = vadd.f32 0.0, %v739
    %v741 = vpop.f32.mrf.mxu0
    %v742 = vadd.f32 0.0, %v741
    %743 = vmatmul.bf16.gmra.mxu0 %v637
    %v744 = vpop.f32.mrf.mxu0
    %v745 = vadd.f32 0.0, %v744
    %v746 = vpop.f32.mrf.mxu0
    %v747 = vadd.f32 0.0, %v746
    %748 = vmatmul.bf16.gmra.mxu0 %v638
    %v749 = vpop.f32.mrf.mxu0
    %v750 = vadd.f32 0.0, %v749
    %v751 = vpop.f32.mrf.mxu0
    %v752 = vadd.f32 0.0, %v751
    %753 = vmatmul.bf16.gmra.mxu0 %v639
    %v754 = vpop.f32.mrf.mxu0
    %v755 = vadd.f32 0.0, %v754
    %v756 = vpop.f32.mrf.mxu0
    %v757 = vadd.f32 0.0, %v756
    %758 = vmatmul.bf16.gmra.mxu0 %v640
    %v759 = vpop.f32.mrf.mxu0
    %v760 = vadd.f32 0.0, %v759
    %v761 = vpop.f32.mrf.mxu0
    %v762 = vadd.f32 0.0, %v761
    %763 = vmatmul.bf16.gmra.mxu0 %v641
    %v764 = vpop.f32.mrf.mxu0
    %v765 = vadd.f32 0.0, %v764
    %v766 = vpop.f32.mrf.mxu0
    %v767 = vadd.f32 0.0, %v766
    %768 = vmatmul.bf16.gmra.mxu0 %v642
    %v769 = vpop.f32.mrf.mxu0
    %v770 = vadd.f32 0.0, %v769
    %v771 = vpop.f32.mrf.mxu0
    %v772 = vadd.f32 0.0, %v771
    %773 = vmatmul.bf16.gmra.mxu0 %v643
    %v774 = vpop.f32.mrf.mxu0
    %v775 = vadd.f32 0.0, %v774
    %v776 = vpop.f32.mrf.mxu0
    %v777 = vadd.f32 0.0, %v776
    %778 = vmatmul.bf16.gmra.mxu0 %v644
    %v779 = vpop.f32.mrf.mxu0
    %v780 = vadd.f32 0.0, %v779
    %v781 = vpop.f32.mrf.mxu0
    %v782 = vadd.f32 0.0, %v781
    %783 = vmatmul.bf16.gmra.mxu0 %v645
    %v784 = vpop.f32.mrf.mxu0
    %v785 = vadd.f32 0.0, %v784
    %v786 = vpop.f32.mrf.mxu0
    %v787 = vadd.f32 0.0, %v786
    %788 = vmatmul.bf16.gmra.mxu0 %v646
    %v789 = vpop.f32.mrf.mxu0
    %v790 = vadd.f32 0.0, %v789
    %v791 = vpop.f32.mrf.mxu0
    %v792 = vadd.f32 0.0, %v791
    %793 = vmatmul.bf16.gmra.mxu0 %v647
    %v794 = vpop.f32.mrf.mxu0
    %v795 = vadd.f32 0.0, %v794
    %v796 = vpop.f32.mrf.mxu0
    %v797 = vadd.f32 0.0, %v796
    %798 = vmatmul.bf16.gmra.mxu0 %v648
    %v799 = vpop.f32.mrf.mxu0
    %v800 = vadd.f32 0.0, %v799
    %v801 = vpop.f32.mrf.mxu0
    %v802 = vadd.f32 0.0, %v801
    %803 = vdwg.mxu0
    %v804 = vadd.f32 %v725, %v727
    %v805 = vadd.f32 %v804, %v730
    %v806 = vadd.f32 %v805, %v732
    %v807 = vadd.f32 %v806, %v735
    %v808 = vadd.f32 %v807, %v737
    %v809 = vadd.f32 %v808, %v740
    %v810 = vadd.f32 %v809, %v742
    %v811 = vadd.f32 %v810, %v745
    %v812 = vadd.f32 %v811, %v747
    %v813 = vadd.f32 %v812, %v750
    %v814 = vadd.f32 %v813, %v752
    %v815 = vadd.f32 %v814, %v755
    %v816 = vadd.f32 %v815, %v757
    %v817 = vadd.f32 %v816, %v760
    %v818 = vadd.f32 %v817, %v762
    %v819 = vadd.f32 %v818, %v765
    %v820 = vadd.f32 %v819, %v767
    %v821 = vadd.f32 %v820, %v770
    %v822 = vadd.f32 %v821, %v772
    %v823 = vadd.f32 %v822, %v775
    %v824 = vadd.f32 %v823, %v777
    %v825 = vadd.f32 %v824, %v780
    %v826 = vadd.f32 %v825, %v782
    %v827 = vadd.f32 %v826, %v785
    %v828 = vadd.f32 %v827, %v787
    %v829 = vadd.f32 %v828, %v790
    %v830 = vadd.f32 %v829, %v792
    %v831 = vadd.f32 %v830, %v795
    %v832 = vadd.f32 %v831, %v797
    %v833 = vadd.f32 %v832, %v800
    %v834 = vadd.f32 %v833, %v802
    %v835 = vrot.slane %v834, 4
    %v836 = vadd.f32 %v834, %v835
    %v837 = vrot.slane %v836, 2
    %v838 = vadd.f32 %v836, %v837
    %v839 = vrot.slane %v838, 1
    %v840 = vadd.f32 %v838, %v839
    %v841 = vmul.f32 %v840, 0.00390625
    %v842 = vsub.f32 %v725, %v841
    %v843 = vsub.f32 %v727, %v841
    %v844 = vsub.f32 %v730, %v841
    %v845 = vsub.f32 %v732, %v841
    %v846 = vsub.f32 %v735, %v841
    %v847 = vsub.f32 %v737, %v841
    %v848 = vsub.f32 %v740, %v841
    %v849 = vsub.f32 %v742, %v841
    %v850 = vsub.f32 %v745, %v841
    %v851 = vsub.f32 %v747, %v841
    %v852 = vsub.f32 %v750, %v841
    %v853 = vsub.f32 %v752, %v841
    %v854 = vsub.f32 %v755, %v841
    %v855 = vsub.f32 %v757, %v841
    %v856 = vsub.f32 %v760, %v841
    %v857 = vsub.f32 %v762, %v841
    %v858 = vsub.f32 %v765, %v841
    %v859 = vsub.f32 %v767, %v841
    %v860 = vsub.f32 %v770, %v841
    %v861 = vsub.f32 %v772, %v841
    %v862 = vsub.f32 %v775, %v841
    %v863 = vsub.f32 %v777, %v841
    %v864 = vsub.f32 %v780, %v841
    %v865 = vsub.f32 %v782, %v841
    %v866 = vsub.f32 %v785, %v841
    %v867 = vsub.f32 %v787, %v841
    %v868 = vsub.f32 %v790, %v841
    %v869 = vsub.f32 %v792, %v841
    %v870 = vsub.f32 %v795, %v841
    %v871 = vsub.f32 %v797, %v841
    %v872 = vsub.f32 %v800, %v841
    %v873 = vsub.f32 %v802, %v841
    %v874 = vmul.f32 %v842, %v842
    %v875 = vmul.f32 %v843, %v843
    %v876 = vmul.f32 %v844, %v844
    %v877 = vmul.f32 %v845, %v845
    %v878 = vmul.f32 %v846, %v846
    %v879 = vmul.f32 %v847, %v847
    %v880 = vmul.f32 %v848, %v848
    %v881 = vmul.f32 %v849, %v849
    %v882 = vmul.f32 %v850, %v850
    %v883 = vmul.f32 %v851, %v851
    %v884 = vmul.f32 %v852, %v852
    %v885 = vmul.f32 %v853, %v853
    %v886 = vmul.f32 %v854, %v854
    %v887 = vmul.f32 %v855, %v855
    %v888 = vmul.f32 %v856, %v856
    %v889 = vmul.f32 %v857, %v857
    %v890 = vmul.f32 %v858, %v858
    %v891 = vmul.f32 %v859, %v859
    %v892 = vmul.f32 %v860, %v860
    %v893 = vmul.f32 %v861, %v861
    %v894 = vmul.f32 %v862, %v862
    %v895 = vmul.f32 %v863, %v863
    %v896 = vmul.f32 %v864, %v864
    %v897 = vmul.f32 %v865, %v865
    %v898 = vmul.f32 %v866, %v866
    %v899 = vmul.f32 %v867, %v867
    %v900 = vmul.f32 %v868, %v868
    %v901 = vmul.f32 %v869, %v869
    %v902 = vmul.f32 %v870, %v870
    %v903 = vmul.f32 %v871, %v871
    %v904 = vmul.f32 %v872, %v872
    %v905 = vmul.f32 %v873, %v873
    %v906 = vadd.f32 %v874, %v875
    %v907 = vadd.f32 %v906, %v876
    %v908 = vadd.f32 %v907, %v877
    %v909 = vadd.f32 %v908, %v878
    %v910 = vadd.f32 %v909, %v879
    %v911 = vadd.f32 %v910, %v880
    %v912 = vadd.f32 %v911, %v881
    %v913 = vadd.f32 %v912, %v882
    %v914 = vadd.f32 %v913, %v883
    %v915 = vadd.f32 %v914, %v884
    %v916 = vadd.f32 %v915, %v885
    %v917 = vadd.f32 %v916, %v886
    %v918 = vadd.f32 %v917, %v887
    %v919 = vadd.f32 %v918, %v888
    %v920 = vadd.f32 %v919, %v889
    %v921 = vadd.f32 %v920, %v890
    %v922 = vadd.f32 %v921, %v891
    %v923 = vadd.f32 %v922, %v892
    %v924 = vadd.f32 %v923, %v893
    %v925 = vadd.f32 %v924, %v894
    %v926 = vadd.f32 %v925, %v895
    %v927 = vadd.f32 %v926, %v896
    %v928 = vadd.f32 %v927, %v897
    %v929 = vadd.f32 %v928, %v898
    %v930 = vadd.f32 %v929, %v899
    %v931 = vadd.f32 %v930, %v900
    %v932 = vadd.f32 %v931, %v901
    %v933 = vadd.f32 %v932, %v902
    %v934 = vadd.f32 %v933, %v903
    %v935 = vadd.f32 %v934, %v904
    %v936 = vadd.f32 %v935, %v905
    %v937 = vrot.slane %v936, 4
    %v938 = vadd.f32 %v936, %v937
    %v939 = vrot.slane %v938, 2
    %v940 = vadd.f32 %v938, %v939
    %v941 = vrot.slane %v940, 1
    %v942 = vadd.f32 %v940, %v941
    %v943 = vmul.f32 %v942, 0.00390625
    %v944 = vadd.f32 %v943, 1e-05
    %v945 = vrsqrt.pop %v944
    %v946 = vmul.f32 %v945, %v944
    %v947 = vmul.f32 %v946, %v945
    %v948 = vmul.f32 0.5, %v947
    %v949 = vsub.f32 1.5, %v948
    %v950 = vmul.f32 %v945, %v949
    %vm951 = vweird.f32 %v944
    %vm952 = vweird.f32 %v945
    %vm953 = vmor %vm951, %vm952
    %v954 = vsel %vm953, %v945, %v950
    %v955 = vmul.f32 %v665, %v954
    %v957 = vperm.slane %v955, 0
    %v959 = vmul.f32 %v842, %v957
    %v960 = vmul.f32 %v843, %v957
    %v961 = vmul.f32 %v844, %v957
    %v962 = vmul.f32 %v845, %v957
    %v963 = vmul.f32 %v846, %v957
    %v964 = vmul.f32 %v847, %v957
    %v965 = vmul.f32 %v848, %v957
    %v966 = vmul.f32 %v849, %v957
    %v967 = vmul.f32 %v850, %v957
    %v968 = vmul.f32 %v851, %v957
    %v969 = vmul.f32 %v852, %v957
    %v970 = vmul.f32 %v853, %v957
    %v971 = vmul.f32 %v854, %v957
    %v972 = vmul.f32 %v855, %v957
    %v973 = vmul.f32 %v856, %v957
    %v974 = vmul.f32 %v857, %v957
    %v975 = vmul.f32 %v858, %v957
    %v976 = vmul.f32 %v859, %v957
    %v977 = vmul.f32 %v860, %v957
    %v978 = vmul.f32 %v861, %v957
    %v979 = vmul.f32 %v862, %v957
    %v980 = vmul.f32 %v863, %v957
    %v981 = vmul.f32 %v864, %v957
    %v982 = vmul.f32 %v865, %v957
    %v983 = vmul.f32 %v866, %v957
    %v984 = vmul.f32 %v867, %v957
    %v985 = vmul.f32 %v868, %v957
    %v986 = vmul.f32 %v869, %v957
    %v987 = vmul.f32 %v870, %v957
    %v988 = vmul.f32 %v871, %v957
    %v989 = vmul.f32 %v872, %v957
    %v990 = vmul.f32 %v873, %v957
    %v992 = vperm.slane %v666, 0
    %v994 = vadd.f32 %v959, %v992
    %v995 = vadd.f32 %v960, %v992
    %v996 = vadd.f32 %v961, %v992
    %v997 = vadd.f32 %v962, %v992
    %v998 = vadd.f32 %v963, %v992
    %v999 = vadd.f32 %v964, %v992
    %v1000 = vadd.f32 %v965, %v992
    %v1001 = vadd.f32 %v966, %v992
    %v1002 = vadd.f32 %v967, %v992
    %v1003 = vadd.f32 %v968, %v992
    %v1004 = vadd.f32 %v969, %v992
    %v1005 = vadd.f32 %v970, %v992
    %v1006 = vadd.f32 %v971, %v992
    %v1007 = vadd.f32 %v972, %v992
    %v1008 = vadd.f32 %v973, %v992
    %v1009 = vadd.f32 %v974, %v992
    %v1010 = vadd.f32 %v975, %v992
    %v1011 = vadd.f32 %v976, %v992
    %v1012 = vadd.f32 %v977, %v992
    %v1013 = vadd.f32 %v978, %v992
    %v1014 = vadd.f32 %v979, %v992
    %v1015 = vadd.f32 %v980, %v992
    %v1016 = vadd.f32 %v981, %v992
    %v1017 = vadd.f32 %v982, %v992
    %v1018 = vadd.f32 %v983, %v992
    %v1019 = vadd.f32 %v984, %v992
    %v1020 = vadd.f32 %v985, %v992
    %v1021 = vadd.f32 %v986, %v992
    %v1022 = vadd.f32 %v987, %v992
    %v1023 = vadd.f32 %v988, %v992
    %v1024 = vadd.f32 %v989, %v992
    %v1025 = vadd.f32 %v990, %v992
    %v1026 = vmax.f32 %v994, 0.0
    %v1027 = vmax.f32 %v995, 0.0
    %v1028 = vmax.f32 %v996, 0.0
    %v1029 = vmax.f32 %v997, 0.0
    %v1030 = vmax.f32 %v998, 0.0
    %v1031 = vmax.f32 %v999, 0.0
    %v1032 = vmax.f32 %v1000, 0.0
    %v1033 = vmax.f32 %v1001, 0.0
    %v1034 = vmax.f32 %v1002, 0.0
    %v1035 = vmax.f32 %v1003, 0.0
    %v1036 = vmax.f32 %v1004, 0.0
    %v1037 = vmax.f32 %v1005, 0.0
    %v1038 = vmax.f32 %v1006, 0.0
    %v1039 = vmax.f32 %v1007, 0.0
    %v1040 = vmax.f32 %v1008, 0.0
    %v1041 = vmax.f32 %v1009, 0.0
    %v1042 = vmax.f32 %v1010, 0.0
    %v1043 = vmax.f32 %v1011, 0.0
    %v1044 = vmax.f32 %v1012, 0.0
    %v1045 = vmax.f32 %v1013, 0.0
    %v1046 = vmax.f32 %v1014, 0.0
    %v1047 = vmax.f32 %v1015, 0.0
    %v1048 = vmax.f32 %v1016, 0.0
    %v1049 = vmax.f32 %v1017, 0.0
    %v1050 = vmax.f32 %v1018, 0.0
    %v1051 = vmax.f32 %v1019, 0.0
    %v1052 = vmax.f32 %v1020, 0.0
    %v1053 = vmax.f32 %v1021, 0.0
    %v1054 = vmax.f32 %v1022, 0.0
    %v1055 = vmax.f32 %v1023, 0.0
    %v1056 = vmax.f32 %v1024, 0.0
    %v1057 = vmax.f32 %v1025, 0.0
    %v1058 = vpack.c.bf16 %v1027, %v1026
    %v1059 = vpack.c.bf16 %v1029, %v1028
    %v1060 = vpack.c.bf16 %v1031, %v1030
    %v1061 = vpack.c.bf16 %v1033, %v1032
    %v1062 = vpack.c.bf16 %v1035, %v1034
    %v1063 = vpack.c.bf16 %v1037, %v1036
    %v1064 = vpack.c.bf16 %v1039, %v1038
    %v1065 = vpack.c.bf16 %v1041, %v1040
    %v1066 = vpack.c.bf16 %v1043, %v1042
    %v1067 = vpack.c.bf16 %v1045, %v1044
    %v1068 = vpack.c.bf16 %v1047, %v1046
    %v1069 = vpack.c.bf16 %v1049, %v1048
    %v1070 = vpack.c.bf16 %v1051, %v1050
    %v1071 = vpack.c.bf16 %v1053, %v1052
    %v1072 = vpack.c.bf16 %v1055, %v1054
    %v1073 = vpack.c.bf16 %v1057, %v1056
    %v1074 = vld [vmem:[#allocation8] sm:$0xf]
    %v1075 = vld [vmem:[#allocation8 + $0x4] sm:$0xf]
    %v1076 = vld [vmem:[#allocation8 + $0x8] sm:$0xf]
    %v1077 = vld [vmem:[#allocation8 + $0xc] sm:$0xf]
    %v1078 = vld [vmem:[#allocation8 + $0x10] sm:$0xf]
    %v1079 = vld [vmem:[#allocation8 + $0x14] sm:$0xf]
    %v1080 = vld [vmem:[#allocation8 + $0x18] sm:$0xf]
    %v1081 = vld [vmem:[#allocation8 + $0x1c] sm:$0xf]
    %v1082 = vld [vmem:[#allocation8 + $0x20] sm:$0xf]
    %v1083 = vld [vmem:[#allocation8 + $0x24] sm:$0xf]
    %v1084 = vld [vmem:[#allocation8 + $0x28] sm:$0xf]
    %v1085 = vld [vmem:[#allocation8 + $0x2c] sm:$0xf]
    %v1086 = vld [vmem:[#allocation8 + $0x30] sm:$0xf]
    %v1087 = vld [vmem:[#allocation8 + $0x34] sm:$0xf]
    %v1088 = vld [vmem:[#allocation8 + $0x38] sm:$0xf]
    %v1089 = vld [vmem:[#allocation8 + $0x3c] sm:$0xf]
    %v1090 = vld [vmem:[%s8] sm:$0x1]
    %v1092 = vperm.slane %v1090, 0
    %v1110 = vunpack.c.l.b16 %v1074
    %v1111 = vunpack.c.l.b16 %v1075
    %v1112 = vunpack.c.l.b16 %v1076
    %v1113 = vunpack.c.l.b16 %v1077
    %v1114 = vunpack.c.l.b16 %v1078
    %v1115 = vunpack.c.l.b16 %v1079
    %v1116 = vunpack.c.l.b16 %v1080
    %v1117 = vunpack.c.l.b16 %v1081
    %v1118 = vunpack.c.l.b16 %v1082
    %v1119 = vunpack.c.l.b16 %v1083
    %v1120 = vunpack.c.l.b16 %v1084
    %v1121 = vunpack.c.l.b16 %v1085
    %v1122 = vunpack.c.l.b16 %v1086
    %v1123 = vunpack.c.l.b16 %v1087
    %v1124 = vunpack.c.l.b16 %v1088
    %v1125 = vunpack.c.l.b16 %v1089
    %v1126 = vpack.c.b16 %v1111, %v1110
    %v1127 = vpack.c.b16 %v1113, %v1112
    %v1128 = vpack.c.b16 %v1115, %v1114
    %v1129 = vpack.c.b16 %v1117, %v1116
    %v1130 = vpack.c.b16 %v1119, %v1118
    %v1131 = vpack.c.b16 %v1121, %v1120
    %v1132 = vpack.c.b16 %v1123, %v1122
    %v1133 = vpack.c.b16 %v1125, %v1124
    %1142 = vmatpush.bf16.msra.mxu0 %v1133
    %1143 = vmatpush.bf16.msra.mxu0 %v1132
    %1144 = vmatpush.bf16.msra.mxu0 %v1131
    %1145 = vmatpush.bf16.msra.mxu0 %v1130
    %1146 = vmatpush.bf16.msra.mxu0 %v1129
    %1147 = vmatpush.bf16.msra.mxu0 %v1128
    %1148 = vmatpush.bf16.msra.mxu0 %v1127
    %1149 = vmatpush.bf16.msra.mxu0 %v1126
    %1150 = vmatmul.bf16.gmra.mxu0 %v1058
    %v1151 = vpop.f32.mrf.mxu0
    %v1152 = vadd.f32 %v1092, %v1151
    %v1153 = vpop.f32.mrf.mxu0
    %v1154 = vadd.f32 %v1092, %v1153
    %1155 = vmatmul.bf16.gmra.mxu0 %v1059
    %v1156 = vpop.f32.mrf.mxu0
    %v1157 = vadd.f32 %v1092, %v1156
    %v1158 = vpop.f32.mrf.mxu0
    %v1159 = vadd.f32 %v1092, %v1158
    %1160 = vmatmul.bf16.gmra.mxu0 %v1060
    %v1161 = vpop.f32.mrf.mxu0
    %v1162 = vadd.f32 %v1092, %v1161
    %v1163 = vpop.f32.mrf.mxu0
    %v1164 = vadd.f32 %v1092, %v1163
    %1165 = vmatmul.bf16.gmra.mxu0 %v1061
    %v1166 = vpop.f32.mrf.mxu0
    %v1167 = vadd.f32 %v1092, %v1166
    %v1168 = vpop.f32.mrf.mxu0
    %v1169 = vadd.f32 %v1092, %v1168
    %1170 = vmatmul.bf16.gmra.mxu0 %v1062
    %v1171 = vpop.f32.mrf.mxu0
    %v1172 = vadd.f32 %v1092, %v1171
    %v1173 = vpop.f32.mrf.mxu0
    %v1174 = vadd.f32 %v1092, %v1173
    %1175 = vmatmul.bf16.gmra.mxu0 %v1063
    %v1176 = vpop.f32.mrf.mxu0
    %v1177 = vadd.f32 %v1092, %v1176
    %v1178 = vpop.f32.mrf.mxu0
    %v1179 = vadd.f32 %v1092, %v1178
    %1180 = vmatmul.bf16.gmra.mxu0 %v1064
    %v1181 = vpop.f32.mrf.mxu0
    %v1182 = vadd.f32 %v1092, %v1181
    %v1183 = vpop.f32.mrf.mxu0
    %v1184 = vadd.f32 %v1092, %v1183
    %1185 = vmatmul.bf16.gmra.mxu0 %v1065
    %v1186 = vpop.f32.mrf.mxu0
    %v1187 = vadd.f32 %v1092, %v1186
    %v1188 = vpop.f32.mrf.mxu0
    %v1189 = vadd.f32 %v1092, %v1188
    %1190 = vmatmul.bf16.gmra.mxu0 %v1066
    %v1191 = vpop.f32.mrf.mxu0
    %v1192 = vadd.f32 %v1092, %v1191
    %v1193 = vpop.f32.mrf.mxu0
    %v1194 = vadd.f32 %v1092, %v1193
    %1195 = vmatmul.bf16.gmra.mxu0 %v1067
    %v1196 = vpop.f32.mrf.mxu0
    %v1197 = vadd.f32 %v1092, %v1196
    %v1198 = vpop.f32.mrf.mxu0
    %v1199 = vadd.f32 %v1092, %v1198
    %1200 = vmatmul.bf16.gmra.mxu0 %v1068
    %v1201 = vpop.f32.mrf.mxu0
    %v1202 = vadd.f32 %v1092, %v1201
    %v1203 = vpop.f32.mrf.mxu0
    %v1204 = vadd.f32 %v1092, %v1203
    %1205 = vmatmul.bf16.gmra.mxu0 %v1069
    %v1206 = vpop.f32.mrf.mxu0
    %v1207 = vadd.f32 %v1092, %v1206
    %v1208 = vpop.f32.mrf.mxu0
    %v1209 = vadd.f32 %v1092, %v1208
    %1210 = vmatmul.bf16.gmra.mxu0 %v1070
    %v1211 = vpop.f32.mrf.mxu0
    %v1212 = vadd.f32 %v1092, %v1211
    %v1213 = vpop.f32.mrf.mxu0
    %v1214 = vadd.f32 %v1092, %v1213
    %1215 = vmatmul.bf16.gmra.mxu0 %v1071
    %v1216 = vpop.f32.mrf.mxu0
    %v1217 = vadd.f32 %v1092, %v1216
    %v1218 = vpop.f32.mrf.mxu0
    %v1219 = vadd.f32 %v1092, %v1218
    %1220 = vmatmul.bf16.gmra.mxu0 %v1072
    %v1221 = vpop.f32.mrf.mxu0
    %v1222 = vadd.f32 %v1092, %v1221
    %v1223 = vpop.f32.mrf.mxu0
    %v1224 = vadd.f32 %v1092, %v1223
    %1225 = vmatmul.bf16.gmra.mxu0 %v1073
    %v1226 = vpop.f32.mrf.mxu0
    %v1227 = vadd.f32 %v1092, %v1226
    %v1228 = vpop.f32.mrf.mxu0
    %v1229 = vadd.f32 %v1092, %v1228
    %1230 = vdwg.mxu0
    %1231 = vst [vmem:[#allocation10] sm:$0xff] %v1152
    %1232 = vst [vmem:[#allocation10 + $0x8] sm:$0xff] %v1154
    %1233 = vst [vmem:[#allocation10 + $0x10] sm:$0xff] %v1157
    %1234 = vst [vmem:[#allocation10 + $0x18] sm:$0xff] %v1159
    %1235 = vst [vmem:[#allocation10 + $0x20] sm:$0xff] %v1162
    %1236 = vst [vmem:[#allocation10 + $0x28] sm:$0xff] %v1164
    %1237 = vst [vmem:[#allocation10 + $0x30] sm:$0xff] %v1167
    %1238 = vst [vmem:[#allocation10 + $0x38] sm:$0xff] %v1169
    %1239 = vst [vmem:[#allocation10 + $0x40] sm:$0xff] %v1172
    %1240 = vst [vmem:[#allocation10 + $0x48] sm:$0xff] %v1174
    %1241 = vst [vmem:[#allocation10 + $0x50] sm:$0xff] %v1177
    %1242 = vst [vmem:[#allocation10 + $0x58] sm:$0xff] %v1179
    %1243 = vst [vmem:[#allocation10 + $0x60] sm:$0xff] %v1182
    %1244 = vst [vmem:[#allocation10 + $0x68] sm:$0xff] %v1184
    %1245 = vst [vmem:[#allocation10 + $0x70] sm:$0xff] %v1187
    %1246 = vst [vmem:[#allocation10 + $0x78] sm:$0xff] %v1189
    %1247 = vst [vmem:[#allocation10 + $0x80] sm:$0xff] %v1192
    %1248 = vst [vmem:[#allocation10 + $0x88] sm:$0xff] %v1194
    %1249 = vst [vmem:[#allocation10 + $0x90] sm:$0xff] %v1197
    %1250 = vst [vmem:[#allocation10 + $0x98] sm:$0xff] %v1199
    %1251 = vst [vmem:[#allocation10 + $0xa0] sm:$0xff] %v1202
    %1252 = vst [vmem:[#allocation10 + $0xa8] sm:$0xff] %v1204
    %1253 = vst [vmem:[#allocation10 + $0xb0] sm:$0xff] %v1207
    %1254 = vst [vmem:[#allocation10 + $0xb8] sm:$0xff] %v1209
    %1255 = vst [vmem:[#allocation10 + $0xc0] sm:$0xff] %v1212
    %1256 = vst [vmem:[#allocation10 + $0xc8] sm:$0xff] %v1214
    %1257 = vst [vmem:[#allocation10 + $0xd0] sm:$0xff] %v1217
    %1258 = vst [vmem:[#allocation10 + $0xd8] sm:$0xff] %v1219
    %1259 = vst [vmem:[#allocation10 + $0xe0] sm:$0xff] %v1222
    %1260 = vst [vmem:[#allocation10 + $0xe8] sm:$0xff] %v1224
    %1261 = vst [vmem:[#allocation10 + $0xf0] sm:$0xff] %v1227
    %1262 = vst [vmem:[#allocation10 + $0xf8] sm:$0xff] %v1229
    // Predicated region
    $region54: #{tpu_custom_call.1} parent=1 // pred_check
      _
    $region55: #{tpu_custom_call.1} parent=1 // pred_check_branch
      %1264 = sbr.rel (0) target = $region57
    $region56: #{tpu_custom_call.1} parent=1 // pred_region
      %1266 = vsyncadd [#allocation4], 0
      %s1267 = sshll.u32 [#allocation10], 4
      %s1268 = int_to_ptr.vmem [resolvable:$true] %s1267
      %s1269 = sshll.u32 %s9, 4
      %s1270 = int_to_ptr.hbm [resolvable:$true] %s1269
      %1275 = dma.vmem_to_hbm [thread:$0]  %s1268, 4096, %s1270, [#allocation4], 128, 128, 8
    $region57: #{tpu_custom_call.1} parent=1 // pred_fallthru
      _
    // Predicated region
    $region58: #{tpu_custom_call.1} parent=1 // pred_check
      _
    $region59: #{tpu_custom_call.1} parent=1 // pred_check_branch
      %1277 = sbr.rel (0) target = $region61
    $region60: #{tpu_custom_call.1} parent=1 // pred_region
      %1279 = dma.done [#allocation4], 4096
    $region61: #{tpu_custom_call.1} parent=1 // pred_fallthru
      _
    %1280 = vsyncpa [#allocation3], 1
    %1281 = vsyncpa [#allocation6], 1
    %1282 = vsyncpa [#allocation9], 1
    %1283 = vsyncpa [#allocation4], 1

</llo_original>
